<compile_context>
chip_gen: v5e
topology: v5e:2x2
jax: 0.10.0
libtpu: 0.0.40
codegen_flags: <defaults>
</compile_context>

<pallas_src>
import math

import jax
import jax.numpy as jnp
from jax.experimental import pallas as pl
from jax.experimental.pallas import tpu as pltpu

EPS = 1e-6

VMEM_LIMIT_BYTES = 40 << 20   # scoped-VMEM request (v7x has 64 MiB/TC physical)
VMEM_BUDGET_BYTES = 36 << 20  # what we allow one block's working set to use

# Native sublane multiple per element size (packed sub-32-bit tiles).
_SUBLANE_BY_ITEMSIZE = {8: 8, 4: 8, 2: 16, 1: 32}


# ---------------------------------------------------------------------------
# Kernels
# ---------------------------------------------------------------------------
def _normalize_last_kernel(x_ref, gain_ref, bias_ref, o_ref):
    """Normalize over the last (lane) axis. x_ref: (tile_rows, F); gain/bias: (1, F)."""
    n = x_ref.shape[-1]
    x = x_ref[...].astype(jnp.float32)
    # Two-pass moments (matches torch.var numerics; avoids E[x^2]-mu^2
    # cancellation). XLU lane reductions; VPU stays mostly idle.
    mu = jnp.mean(x, axis=-1, keepdims=True)
    d = x - mu
    # Unbiased variance (N-1). n == 1 yields nan, matching torch.var default.
    var = jnp.sum(d * d, axis=-1, keepdims=True) / jnp.float32(n - 1)
    sigma = jnp.sqrt(var + jnp.float32(EPS))
    # Exact reciprocal of the (tile_rows, 1) column: a handful of divides per
    # block, completely hidden under the HBM DMA.
    inv = pl.reciprocal(sigma + jnp.float32(EPS), approx=False)
    g = gain_ref[...].astype(jnp.float32)
    b = bias_ref[...].astype(jnp.float32)
    # Epilogue written directly into o_ref (no separate f32 `y` block kept live).
    o_ref[...] = (d * inv * g + b).astype(o_ref.dtype)


def _normalize_mid_kernel(x_ref, gain_ref, bias_ref, o_ref):
    """Normalize over a middle axis. x_ref: (tile_pre, F, post); gain/bias: (1, F, 1).

    The reduction runs over the sublane axis (axis=1) inside the kernel (XLU),
    so the wrapper never has to moveaxis/transpose x through HBM.
    """
    n = x_ref.shape[1]
    x = x_ref[...].astype(jnp.float32)
    mu = jnp.mean(x, axis=1, keepdims=True)
    d = x - mu
    var = jnp.sum(d * d, axis=1, keepdims=True) / jnp.float32(n - 1)
    sigma = jnp.sqrt(var + jnp.float32(EPS))
    inv = pl.reciprocal(sigma + jnp.float32(EPS), approx=False)
    g = gain_ref[...].astype(jnp.float32)
    b = bias_ref[...].astype(jnp.float32)
    o_ref[...] = (d * inv * g + b).astype(o_ref.dtype)


# ---------------------------------------------------------------------------
# Tile sizing
# ---------------------------------------------------------------------------
def _sublane(itemsize):
    return _SUBLANE_BY_ITEMSIZE.get(itemsize, 8)


def _rows_cap(row_elems, itemsize):
    """Max leading-dim tile that keeps the block's VMEM working set in budget.

    Per block element: double-buffered input + output (input dtype) plus
    roughly three live f32 temporaries inside the kernel body.
    """
    per_elem = 4 * itemsize + 3 * 4
    max_elems = VMEM_BUDGET_BYTES // per_elem
    return max_elems // max(1, row_elems)


def _choose_tile_rows(rows, feats, itemsize):
    """Row tile for the last-axis path. None => fall back to plain XLA."""
    sub = _sublane(itemsize)
    cap = _rows_cap(feats, itemsize)
    if rows <= sub:
        return int(rows) if cap >= rows else None   # full-extent block (always legal)
    if cap < 8:                                     # can't even fit a minimal legal tile
        return None
    # ~4 MiB f32-equivalent block (scaled by itemsize so bf16/int8 blocks keep
    # the same f32 working set once upcast in-kernel).
    target = ((4 << 20) * itemsize) // 4
    t = max(sub, target // max(1, feats * itemsize))
    # >= ~4 grid steps keeps both v7x TensorCores busy; on single-TC v5e/v6e
    # this only shrinks blocks for inputs small enough not to matter.
    t = min(t, pl.cdiv(rows, 4))
    t = min(t, cap)
    t = max(sub, (t // sub) * sub)                  # native sublane multiple
    if t > cap:
        t = max(8, (cap // 8) * 8)                  # still a legal (mult-of-8) tile
    return int(min(t, rows))


def _choose_tile_pre(pre, feats, post, itemsize):
    """Leading-dim tile for the middle-axis path. None => fall back to XLA."""
    cap = _rows_cap(feats * post, itemsize)
    if cap < 1:
        return None
    target = ((4 << 20) * itemsize) // 4
    t = max(1, target // max(1, feats * post * itemsize))
    t = min(t, pl.cdiv(pre, 4))
    t = min(t, cap)
    return int(max(1, min(t, pre)))


# ---------------------------------------------------------------------------
# Wrappers
# ---------------------------------------------------------------------------
def _normalize_jax(x, gain, bias, dim):
    """Plain-XLA fallback (huge feature dims that can't fit a single VMEM block)."""
    xf = x.astype(jnp.float32)
    mu = jnp.mean(xf, axis=dim, keepdims=True)
    var = jnp.var(xf, axis=dim, keepdims=True, ddof=1)
    sigma = jnp.sqrt(var + EPS)
    shape = [1] * x.ndim
    shape[dim] = x.shape[dim]
    g = gain.reshape(shape).astype(jnp.float32)
    b = bias.reshape(shape).astype(jnp.float32)
    return (g * (xf - mu) / (sigma + EPS) + b).astype(x.dtype)


def _compiler_params():
    return pltpu.CompilerParams(
        dimension_semantics=("parallel",),
        vmem_limit_bytes=VMEM_LIMIT_BYTES,
    )


def _normalize_last(x, gain, bias):
    # NOTE on lane-sparse features (F < 128 / F % 128 != 0): padding F at the
    # wrapper would make the in-kernel stores lane-dense but adds a full
    # padded-width HBM pad + un-pad pass, which costs more than the masked
    # stores it removes for this memory-bound op. The right fix is keeping
    # feature dims multiples of 128 at the model level.
    # TODO(synk): in-kernel row packing (k rows per 128-lane vreg with a
    # segmented reduction) would recover lane density with zero extra HBM
    # traffic for small F.
    orig_shape = x.shape
    feats = orig_shape[-1]
    x2 = x.reshape(-1, feats)
    rows = x2.shape[0]
    itemsize = jnp.dtype(x2.dtype).itemsize

    tile_rows = _choose_tile_rows(rows, feats, itemsize)
    if tile_rows is None:
        # Feature dim too large for one VMEM block; degrade gracefully.
        return _normalize_jax(x, gain, bias, x.ndim - 1)

    gain2 = gain.reshape(1, feats)
    bias2 = bias.reshape(1, feats)
    grid = (pl.cdiv(rows, tile_rows),)  # trailing partial block is masked by Pallas

    out = pl.pallas_call(
        _normalize_last_kernel,
        out_shape=jax.ShapeDtypeStruct((rows, feats), x.dtype),
        grid_spec=pl.GridSpec(
            grid=grid,
            in_specs=[
                pl.BlockSpec((tile_rows, feats), lambda i: (i, 0)),
                pl.BlockSpec((1, feats), lambda i: (0, 0)),
                pl.BlockSpec((1, feats), lambda i: (0, 0)),
            ],
            out_specs=pl.BlockSpec((tile_rows, feats), lambda i: (i, 0)),
        ),
        compiler_params=_compiler_params(),
    )(x2, gain2, bias2)
    return out.reshape(orig_shape)


def _normalize_mid(x, gain, bias, dim):
    shape = x.shape
    feats = shape[dim]
    pre = math.prod(shape[:dim]) if dim > 0 else 1
    post = math.prod(shape[dim + 1:])
    x3 = x.reshape(pre, feats, post)  # pure view: no transpose / HBM traffic
    itemsize = jnp.dtype(x.dtype).itemsize

    tile_pre = _choose_tile_pre(pre, feats, post, itemsize)
    if tile_pre is None:
        return _normalize_jax(x, gain, bias, dim)

    gain3 = gain.reshape(1, feats, 1)
    bias3 = bias.reshape(1, feats, 1)
    grid = (pl.cdiv(pre, tile_pre),)

    out = pl.pallas_call(
        _normalize_mid_kernel,
        out_shape=jax.ShapeDtypeStruct((pre, feats, post), x.dtype),
        grid_spec=pl.GridSpec(
            grid=grid,
            in_specs=[
                pl.BlockSpec((tile_pre, feats, post), lambda i: (i, 0, 0)),
                pl.BlockSpec((1, feats, 1), lambda i: (0, 0, 0)),
                pl.BlockSpec((1, feats, 1), lambda i: (0, 0, 0)),
            ],
            out_specs=pl.BlockSpec((tile_pre, feats, post), lambda i: (i, 0, 0)),
        ),
        compiler_params=_compiler_params(),
    )(x3, gain3, bias3)
    return out.reshape(shape)


def normalize(x, gain, bias, dim=-1):
    """Pallas implementation of Normalize.forward(x, dim)."""
    ndim = x.ndim
    if dim < 0:
        dim += ndim
    feats = x.shape[dim]
    assert gain.shape == (feats,) and bias.shape == (feats,)
    if x.size == 0:
        return x
    if dim == ndim - 1:
        return _normalize_last(x, gain, bias)
    return _normalize_mid(x, gain, bias, dim)


# ---------------------------------------------------------------------------
# Self-test
# ---------------------------------------------------------------------------
if __name__ == "__main__":
    key = jax.random.PRNGKey(0)
    k1, k2, k3, k4 = jax.random.split(key, 4)

    # Case 1: default dim=-1, f32 activations (batch=2, seq=8, hidden=32).
    hidden = 32
    x = jax.random.normal(k1, (2, 8, hidden), dtype=jnp.float32)
    gain = jnp.ones((hidden,), jnp.float32) + 0.01 * jnp.arange(hidden, dtype=jnp.float32)
    bias = jnp.zeros((hidden,), jnp.float32) + 0.001 * jnp.arange(hidden, dtype=jnp.float32)
    out = jax.block_until_ready(normalize(x, gain, bias))
    ref = _normalize_jax(x, gain, bias, 2)
    assert out.shape == x.shape and out.dtype == x.dtype
    assert jnp.allclose(out, ref, atol=1e-5, rtol=1e-5), "case1 mismatch"

    # Case 2: row count not a multiple of the tile (exercises masked trailing block).
    x2 = jax.random.normal(k2, (3, 7, hidden), dtype=jnp.float32)
    out2 = jax.block_until_ready(normalize(x2, gain, bias))
    ref2 = _normalize_jax(x2, gain, bias, 2)
    assert jnp.allclose(out2, ref2, atol=1e-5, rtol=1e-5), "case2 mismatch"

    # Case 3: normalize over a middle axis (dim=1) with no host-side transposes.
    feats3 = 16
    x3 = jax.random.normal(k3, (2, feats3, 4, 8), dtype=jnp.float32)
    gain3 = jnp.ones((feats3,), jnp.float32) + 0.02 * jnp.arange(feats3, dtype=jnp.float32)
    bias3 = 0.003 * jnp.arange(feats3, dtype=jnp.float32)
    out3 = jax.block_until_ready(normalize(x3, gain3, bias3, dim=1))
    ref3 = _normalize_jax(x3, gain3, bias3, 1)
    assert out3.shape == x3.shape
    assert jnp.allclose(out3, ref3, atol=1e-5, rtol=1e-5), "case3 mismatch"

    # Case 4: bf16 activations keep bf16 HBM I/O (16-row native sublane tiles).
    xb = jax.random.normal(k4, (4, 16, 128), dtype=jnp.bfloat16)
    gb = jnp.ones((128,), jnp.float32)
    bb = jnp.zeros((128,), jnp.float32)
    outb = jax.block_until_ready(normalize(xb, gb, bb))
    assert outb.dtype == jnp.bfloat16 and outb.shape == xb.shape
    refb = _normalize_jax(xb, gb, bb, 2)
    assert jnp.allclose(outb.astype(jnp.float32), refb.astype(jnp.float32),
                        atol=2e-2, rtol=2e-2), "case4 mismatch"

    print("KERNEL_OK")
</pallas_src>

<mosaic_0001>
module attributes {stable_mosaic.version = 11 : i64} {
  func.func @_normalize_last_kernel(%arg0: i32, %arg1: memref<8x32xf32, #tpu.memory_space<vmem>>, %arg2: memref<1x32xf32, #tpu.memory_space<vmem>>, %arg3: memref<1x32xf32, #tpu.memory_space<vmem>>, %arg4: memref<8x32xf32, #tpu.memory_space<vmem>>) attributes {dimension_semantics = [#tpu.dimension_semantics<parallel>], iteration_bounds = array<i64: 2>, scalar_prefetch = 0 : i64, scratch_operands = 0 : i64, tpu.core_type = #tpu.core_type<tc>, window_params = [{transform_indices = @transform_0, window_bounds = array<i64: 8, 32>}, {pipeline_mode = #tpu.pipeline_mode<synchronous>, transform_indices = @transform_1, window_bounds = array<i64: 1, 32>}, {pipeline_mode = #tpu.pipeline_mode<synchronous>, transform_indices = @transform_2, window_bounds = array<i64: 1, 32>}, {transform_indices = @transform_3, window_bounds = array<i64: 8, 32>}]} {
    %c0 = arith.constant 0 : index
    %c0_0 = arith.constant 0 : index
    %0 = vector.load %arg1[%c0, %c0_0] : memref<8x32xf32, #tpu.memory_space<vmem>>, vector<8x32xf32>
    %cst = arith.constant dense<0.000000e+00> : vector<8xf32>
    %1 = vector.multi_reduction <add>, %0, %cst [1] : vector<8x32xf32> to vector<8xf32>
    %2 = vector.shape_cast %1 : vector<8xf32> to vector<8x1xf32>
    %cst_1 = arith.constant 3.200000e+01 : f32
    %3 = vector.broadcast %cst_1 : f32 to vector<8x1xf32>
    %4 = arith.divf %2, %3 : vector<8x1xf32>
    %5 = vector.broadcast %4 : vector<8x1xf32> to vector<8x32xf32>
    %6 = arith.subf %0, %5 : vector<8x32xf32>
    %7 = arith.mulf %6, %6 : vector<8x32xf32>
    %cst_2 = arith.constant dense<0.000000e+00> : vector<8xf32>
    %8 = vector.multi_reduction <add>, %7, %cst_2 [1] : vector<8x32xf32> to vector<8xf32>
    %9 = vector.shape_cast %8 : vector<8xf32> to vector<8x1xf32>
    %cst_3 = arith.constant 3.100000e+01 : f32
    %10 = vector.broadcast %cst_3 : f32 to vector<8x1xf32>
    %11 = arith.divf %9, %10 : vector<8x1xf32>
    %cst_4 = arith.constant 9.99999997E-7 : f32
    %12 = vector.broadcast %cst_4 : f32 to vector<8x1xf32>
    %13 = arith.addf %11, %12 : vector<8x1xf32>
    %14 = math.sqrt %13 : vector<8x1xf32>
    %cst_5 = arith.constant 9.99999997E-7 : f32
    %15 = vector.broadcast %cst_5 : f32 to vector<8x1xf32>
    %16 = arith.addf %14, %15 : vector<8x1xf32>
    %17 = tpu.reciprocal %16 : vector<8x1xf32> -> vector<8x1xf32>
    %c0_6 = arith.constant 0 : index
    %c0_7 = arith.constant 0 : index
    %18 = vector.load %arg2[%c0_6, %c0_7] : memref<1x32xf32, #tpu.memory_space<vmem>>, vector<1x32xf32>
    %c0_8 = arith.constant 0 : index
    %c0_9 = arith.constant 0 : index
    %19 = vector.load %arg3[%c0_8, %c0_9] : memref<1x32xf32, #tpu.memory_space<vmem>>, vector<1x32xf32>
    %20 = vector.broadcast %17 : vector<8x1xf32> to vector<8x32xf32>
    %21 = arith.mulf %6, %20 : vector<8x32xf32>
    %22 = vector.broadcast %18 : vector<1x32xf32> to vector<8x32xf32>
    %23 = arith.mulf %21, %22 : vector<8x32xf32>
    %24 = vector.broadcast %19 : vector<1x32xf32> to vector<8x32xf32>
    %25 = arith.addf %23, %24 : vector<8x32xf32>
    %c0_10 = arith.constant 0 : index
    %c0_11 = arith.constant 0 : index
    %26 = vector.load %arg4[%c0_10, %c0_11] : memref<8x32xf32, #tpu.memory_space<vmem>>, vector<8x32xf32>
    tpu.vector_store %arg4[%c0_10, %c0_11], %25 {strides = array<i32>} : memref<8x32xf32, #tpu.memory_space<vmem>>, vector<8x32xf32>,
    return
  }
  func.func @transform_0(%arg0: i32) -> (i32, i32) {
    %c0_i32 = arith.constant 0 : i32
    %c0_i32_0 = arith.constant 0 : i32
    return %arg0, %c0_i32 : i32, i32
  }
  func.func @transform_1(%arg0: i32) -> (i32, i32) {
    %c0_i32 = arith.constant 0 : i32
    %c0_i32_0 = arith.constant 0 : i32
    %c0_i32_1 = arith.constant 0 : i32
    return %c0_i32, %c0_i32_0 : i32, i32
  }
  func.func @transform_2(%arg0: i32) -> (i32, i32) {
    %c0_i32 = arith.constant 0 : i32
    %c0_i32_0 = arith.constant 0 : i32
    %c0_i32_1 = arith.constant 0 : i32
    return %c0_i32, %c0_i32_0 : i32, i32
  }
  func.func @transform_3(%arg0: i32) -> (i32, i32) {
    %c0_i32 = arith.constant 0 : i32
    %c0_i32_0 = arith.constant 0 : i32
    return %arg0, %c0_i32 : i32, i32
  }
}

</mosaic_0001>

<llo_original>
// kernel: tpu_custom_call.1
$region0: #{tpu_custom_call.1}
  #allocation0 [shape = 'u32[]', space=smem, size = 0x4, offset = 0x4, fixed_abs, tag = 'smem constant byte address 0x4 - core index']
  #allocation1 [shape = 'u32[72,128]{1,0:T(1,128)}', space=vmem, size = 0x9000, scoped, tag = 'internal scratch']
  %s0 = inlined_call_operand.hbm [shape: f32[16,32], index: 0, kind: input, shape index: {}]
  %s1 = inlined_call_operand.hbm [shape: f32[1,32], index: 1, kind: input, shape index: {}]
  %s2 = inlined_call_operand.vmem [shape: f32[1,32], index: 2, kind: input, shape index: {}]
  %s3 = inlined_call_operand.hbm [shape: f32[16,32], index: 3, kind: output, shape index: {}]
  %s4 = sld [smem:[#allocation0]]
  $region53: #{tpu_custom_call.1} parent=0
    _
  %s6 = ssub.s32 1, %s4
  %s7 = scalar_select 0, %s6, %s4
  $region1: #{tpu_custom_call.1} parent=0
    #allocation2 [shape = 'u8[8192]{0}', space=vmem, size = 0x2000, scoped, tag = 'input window, operand 0']
    #allocation3 [shape = 's32[2]{0}', space=sflag, size = 0x8, scoped, tag = 'scoped memory for tpu_custom_call.1']
    #allocation4 [shape = 's32[2]{0}', space=sflag, size = 0x8, scoped, tag = 'scoped memory for tpu_custom_call.1']
    #allocation5 [shape = 'u8[512]{0}', space=vmem, size = 0x400, scoped, tag = 'input window, operand 1, single buffered']
    #allocation6 [shape = 's32[1]{0}', space=sflag, size = 0x4, scoped, tag = 'scoped memory for tpu_custom_call.1']
    #allocation7 [shape = 'u8[8192]{0}', space=vmem, size = 0x2000, scoped, tag = 'output window, operand 0']
    %8 = vsyncpa [#allocation3], 0
    %s9 = scalar_lea.sflag [#allocation3], 1
    %10 = vsyncpa %s9, 0
    %11 = vsyncpa [#allocation6], 0
    %12 = vsyncpa [#allocation4], 0
    %s13 = scalar_lea.sflag [#allocation4], 1
    %14 = vsyncpa %s13, 0
    loop: start=0, step=1, limit=4
    $region2: #{tpu_custom_call.1} parent=1 // loop_pre_header
      _
    $region3: #{tpu_custom_call.1} parent=1 // loop_header
      %s16 = sphi 0, %s20
      %p17 = scmp.ge.s32.totalorder %s16, 4
      %s26 = sphi 0, %s28
      %s29 = sphi 0, %s26
      %s30 = sphi 0, %s29
      %s46 = sphi 0, %s30
      %s50 = sphi 0, %s50
      %s52 = sphi 0, %s50
      %s53 = sphi 0, %s52
      %s67 = sphi 0, %s53
      %s71 = sphi 0, %s71
      %s73 = sphi 0, %s71
      %s74 = sphi 0, %s73
      %s88 = sphi 0, %s74
      %s94 = sphi 0, %s96
      %s97 = sphi 0, %s94
      %s98 = sphi 0, %s97
      %s114 = sphi 0, %s98
    $region4: #{tpu_custom_call.1} parent=1 // loop_header_branch
      %19 = sbr.rel (%p17) target = $region8
    $region5: #{tpu_custom_call.1} parent=1 // loop_body
      %s21 = ssub.s32 %s16, 1
      %s22 = ssub.s32 %s16, 2
      %s23 = sadd.s32 %s16, 1
      %s24 = ssub.s32 %s16, %s23
      %p25 = scmp.eq.s32.totalorder %s24, 0
      %s27 = sadd.s32 %s26, 1
      %s28 = scalar_select %p25, %s26, %s27
      %p31 = pneg %p25
      %p32 = scmp.eq.s32.totalorder %s16, 1
      %p33 = por %p31, %p32
      %p34 = scmp.ne.s32.totalorder %s26, %s29
      %p35 = scmp.eq.s32.totalorder %s16, 0
      %p36 = por %p34, %p35
      %p37 = scmp.ne.s32.totalorder %s26, %s29
      %p38 = scmp.eq.s32.totalorder %s21, 1
      %p39 = por %p37, %p38
      %p40 = scmp.ne.s32.totalorder %s29, %s30
      %p41 = scmp.eq.s32.totalorder %s21, 0
      %p42 = por %p40, %p41
      %p43 = scmp.ne.s32.totalorder %s29, %s30
      %p44 = scmp.eq.s32.totalorder %s22, 1
      %p45 = por %p43, %p44
      %p47 = scmp.ne.s32.totalorder %s30, %s46
      %p48 = scmp.eq.s32.totalorder %s22, 0
      %p49 = por %p47, %p48
      %s51 = sadd.s32 %s50, 1
      %p54 = scmp.eq.s32.totalorder %s16, 1
      %p55 = scmp.ne.s32.totalorder %s50, %s52
      %p56 = scmp.eq.s32.totalorder %s16, 0
      %p57 = por %p55, %p56
      %p58 = scmp.ne.s32.totalorder %s50, %s52
      %p59 = scmp.eq.s32.totalorder %s21, 1
      %p60 = por %p58, %p59
      %p61 = scmp.ne.s32.totalorder %s52, %s53
      %p62 = scmp.eq.s32.totalorder %s21, 0
      %p63 = por %p61, %p62
      %p64 = scmp.ne.s32.totalorder %s52, %s53
      %p65 = scmp.eq.s32.totalorder %s22, 1
      %p66 = por %p64, %p65
      %p68 = scmp.ne.s32.totalorder %s53, %s67
      %p69 = scmp.eq.s32.totalorder %s22, 0
      %p70 = por %p68, %p69
      %s72 = sadd.s32 %s71, 1
      %p75 = scmp.eq.s32.totalorder %s16, 1
      %p76 = scmp.ne.s32.totalorder %s71, %s73
      %p77 = scmp.eq.s32.totalorder %s16, 0
      %p78 = por %p76, %p77
      %p79 = scmp.ne.s32.totalorder %s71, %s73
      %p80 = scmp.eq.s32.totalorder %s21, 1
      %p81 = por %p79, %p80
      %p82 = scmp.ne.s32.totalorder %s73, %s74
      %p83 = scmp.eq.s32.totalorder %s21, 0
      %p84 = por %p82, %p83
      %p85 = scmp.ne.s32.totalorder %s73, %s74
      %p86 = scmp.eq.s32.totalorder %s22, 1
      %p87 = por %p85, %p86
      %p89 = scmp.ne.s32.totalorder %s74, %s88
      %p90 = scmp.eq.s32.totalorder %s22, 0
      %p91 = por %p89, %p90
      %s92 = ssub.s32 %s16, %s23
      %p93 = scmp.eq.s32.totalorder %s92, 0
      %s95 = sadd.s32 %s94, 1
      %s96 = scalar_select %p93, %s94, %s95
      %p99 = pneg %p93
      %p100 = scmp.eq.s32.totalorder %s16, 1
      %p101 = por %p99, %p100
      %p102 = scmp.ne.s32.totalorder %s94, %s97
      %p103 = scmp.eq.s32.totalorder %s16, 0
      %p104 = por %p102, %p103
      %p105 = scmp.ne.s32.totalorder %s94, %s97
      %p106 = scmp.eq.s32.totalorder %s21, 1
      %p107 = por %p105, %p106
      %p108 = scmp.ne.s32.totalorder %s97, %s98
      %p109 = scmp.eq.s32.totalorder %s21, 0
      %p110 = por %p108, %p109
      %p111 = scmp.ne.s32.totalorder %s97, %s98
      %p112 = scmp.eq.s32.totalorder %s22, 1
      %p113 = por %p111, %p112
      %p115 = scmp.ne.s32.totalorder %s98, %s114
      %p116 = scmp.eq.s32.totalorder %s22, 0
      %p117 = por %p115, %p116
      %p118 = scmp.le.s32.totalorder 1, %s16
      %p119 = scmp.lt.s32.totalorder %s16, 3
      %p120 = pnand %p118, %p119
      %p121 = pneg %p120
      // Predicated region
      $region9: #{tpu_custom_call.1} parent=5 // pred_check
        _
      $region10: #{tpu_custom_call.1} parent=5 // pred_check_branch
        %123 = sbr.rel (%p120) target = $region12
      $region11: #{tpu_custom_call.1} parent=5 // pred_region
        %s124 = ssub.s32 %s16, 1
        // Predicated region
        $region13: #{tpu_custom_call.1} parent=11 // pred_check
          %p125 = pneg %p63
        $region14: #{tpu_custom_call.1} parent=11 // pred_check_branch
          %127 = sbr.rel (%p125) target = $region16
        $region15: #{tpu_custom_call.1} parent=11 // pred_region
          %129 = vsyncadd [#allocation6], 0
          %s131 = sshll.u32 %s1, 4
          %s132 = int_to_ptr.hbm [resolvable:$true] %s131
          %s133 = sshll.u32 [#allocation5], 4
          %s134 = int_to_ptr.vmem [resolvable:$true] %s133
          %136 = dma.hbm_to_vmem [thread:$0]  %s132, 16, %s134, [#allocation6]
        $region16: #{tpu_custom_call.1} parent=11 // pred_fallthru
          _
        // Predicated region
        $region17: #{tpu_custom_call.1} parent=11 // pred_check
          %p137 = pneg %p84
        $region18: #{tpu_custom_call.1} parent=11 // pred_check_branch
          %139 = sbr.rel (%p137) target = $region20
        $region19: #{tpu_custom_call.1} parent=11 // pred_region
          _
        $region20: #{tpu_custom_call.1} parent=11 // pred_fallthru
          _
      $region12: #{tpu_custom_call.1} parent=5 // pred_fallthru
        _
      %p140 = scmp.lt.s32.totalorder %s16, 2
      // Predicated region
      $region21: #{tpu_custom_call.1} parent=5 // pred_check
        %p141 = pneg %p140
      $region22: #{tpu_custom_call.1} parent=5 // pred_check_branch
        %143 = sbr.rel (%p141) target = $region24
      $region23: #{tpu_custom_call.1} parent=5 // pred_region
        // Predicated region
        $region25: #{tpu_custom_call.1} parent=23 // pred_check
          %p144 = pneg %p36
        $region26: #{tpu_custom_call.1} parent=23 // pred_check_branch
          %146 = sbr.rel (%p144) target = $region28
        $region27: #{tpu_custom_call.1} parent=23 // pred_region
          %s147 = sand.u32 %s26, 1
          %s148 = scalar_lea.sflag [#allocation3], %s147
          %s149 = sand.u32 %s26, 1
          %s150 = smul.addr %s149, 8
          %s151 = scalar_lea.vmem [#allocation2], %s150
          %153 = vsyncadd %s148, 0
          %s154 = smul.addr %s16, 8
          %s155 = scalar_lea.hbm %s0, %s154
          %s157 = sshll.u32 %s155, 4
          %s158 = int_to_ptr.hbm [resolvable:$true] %s157
          %s159 = sshll.u32 %s151, 4
          %s160 = int_to_ptr.vmem [resolvable:$true] %s159
          %162 = dma.hbm_to_vmem [thread:$0]  %s158, 128, %s160, %s148
        $region28: #{tpu_custom_call.1} parent=23 // pred_fallthru
          _
      $region24: #{tpu_custom_call.1} parent=5 // pred_fallthru
        _
      %p163 = scmp.le.s32.totalorder 1, %s16
      %p164 = scmp.lt.s32.totalorder %s16, 3
      %p165 = pnand %p163, %p164
      %p166 = pneg %p165
      // Predicated region
      $region29: #{tpu_custom_call.1} parent=5 // pred_check
        _
      $region30: #{tpu_custom_call.1} parent=5 // pred_check_branch
        %168 = sbr.rel (%p165) target = $region32
      $region31: #{tpu_custom_call.1} parent=5 // pred_region
        %s169 = ssub.s32 %s16, 1
        %s170 = sand.u32 %s29, 1
        %s171 = scalar_lea.sflag [#allocation3], %s170
        %s172 = sand.u32 %s29, 1
        %s173 = smul.addr %s172, 8
        %s174 = scalar_lea.vmem [#allocation2], %s173
        // Predicated region
        $region33: #{tpu_custom_call.1} parent=31 // pred_check
          %p175 = pneg %p42
        $region34: #{tpu_custom_call.1} parent=31 // pred_check_branch
          %177 = sbr.rel (%p175) target = $region36
        $region35: #{tpu_custom_call.1} parent=31 // pred_region
          %179 = dma.done %s171, 128
        $region36: #{tpu_custom_call.1} parent=31 // pred_fallthru
          _
        // Predicated region
        $region37: #{tpu_custom_call.1} parent=31 // pred_check
          %p180 = pneg %p63
        $region38: #{tpu_custom_call.1} parent=31 // pred_check_branch
          %182 = sbr.rel (%p180) target = $region40
        $region39: #{tpu_custom_call.1} parent=31 // pred_region
          %184 = dma.done [#allocation6], 16
        $region40: #{tpu_custom_call.1} parent=31 // pred_fallthru
          _
        %s185 = sand.u32 %s29, 1
        %s186 = scalar_lea.sflag [#allocation3], %s185
        %s187 = sand.u32 %s29, 1
        %s188 = smul.addr %s187, 8
        %s189 = scalar_lea.vmem [#allocation2], %s188
        %p190 = pneg %p42
        %p191 = pneg %p39
        %p192 = pneg %p63
        %p193 = pneg %p60
        %p194 = pneg %p84
        %p195 = pneg %p81
        %p196 = pneg %p110
        %p197 = pneg %p107
        %s198 = sand.u32 %s97, 1
        %s199 = scalar_lea.sflag [#allocation4], %s198
        %s200 = sand.u32 %s97, 1
        %s201 = smul.addr %s200, 8
        %s202 = scalar_lea.vmem [#allocation7], %s201
        %v203 = vld [vmem:[%s174] sm:$0xff]
        %vm204 = vcmask 261120
        %v205 = vsel %vm204, %v203, 0.0
        %206 = vadd.xlane.f32.xlu0 %v205
        %v207 = vpop.xlane.xlu0 %206
        %v208 = vrcp.pop 32.0
        %v209 = vmul.f32 32.0, %v208
        %v210 = vsub.f32 1.0, %v209
        %v211 = vmul.f32 %v208, %v210
        %v212 = vadd.f32 %v208, %v211
        %vm213 = vweird.f32 %v208
        %v214 = vsel %vm213, %v208, %v212
        %v215 = vmul.f32 %v207, %v214
        %v216 = vsub.f32 %v203, %v215
        %v217 = vmul.f32 %v216, %v216
        %v218 = vsel %vm204, %v217, 0.0
        %219 = vadd.xlane.f32.xlu0 %v218
        %v220 = vpop.xlane.xlu0 %219
        %v221 = vrcp.pop 31.0
        %v222 = vmul.f32 31.0, %v221
        %v223 = vsub.f32 1.0, %v222
        %v224 = vmul.f32 %v221, %v223
        %v225 = vadd.f32 %v221, %v224
        %vm226 = vweird.f32 %v221
        %v227 = vsel %vm226, %v221, %v225
        %v228 = vmul.f32 %v220, %v227
        %v229 = vadd.f32 %v228, 1e-06
        %v230 = vrsqrt.pop %v229
        %v231 = vmul.f32 %v230, %v229
        %v232 = vmul.f32 %v231, %v230
        %v233 = vmul.f32 0.5, %v232
        %v234 = vsub.f32 1.5, %v233
        %v235 = vmul.f32 %v230, %v234
        %v236 = vmul.f32 %v229, %v235
        %vm237 = vcmp.eq.f32.partialorder %v229, inf
        %v238 = vsel %vm237, %v229, %v236
        %vm239 = vcmp.eq.f32.partialorder %v229, 0.0
        %v240 = vand.u32 %v229, 2147483648
        %v241 = vsel %vm239, %v240, %v238
        %v242 = vadd.f32 %v241, 1e-06
        %v243 = vrcp.pop %v242
        %v244 = vmul.f32 %v242, %v243
        %v245 = vsub.f32 1.0, %v244
        %v246 = vmul.f32 %v243, %v245
        %v247 = vadd.f32 %v243, %v246
        %vm248 = vweird.f32 %v242
        %vm249 = vweird.f32 %v243
        %vm250 = vmor %vm248, %vm249
        %v251 = vsel %vm250, %v243, %v247
        %v252 = vand.u32 2147483647, %v242
        %vm253 = vcmp.eq.f32.partialorder %v252, 8.507059e+37
        %v254 = vand.u32 %v242, 2147483648
        %v255 = vor.u32 1.1754944e-38, %v254
        %v256 = vsel %vm253, %v255, %v251
        %v257 = vld [vmem:[#allocation5] sm:$0x1]
        %v258 = vld [vmem:[%s2] sm:$0x1]
        %v259 = vmul.f32 %v216, %v256
        %v261 = vperm.slane %v257, 0
        %v263 = vmul.f32 %v259, %v261
        %v265 = vperm.slane %v258, 0
        %v267 = vadd.f32 %v263, %v265
        %268 = vst.msk [vmem:[%s202] sm:$0xff] %vm204, %v267
        %s269 = sand.u32 %s97, 1
        %s270 = scalar_lea.sflag [#allocation4], %s269
        %s271 = sand.u32 %s97, 1
        %s272 = smul.addr %s271, 8
        %s273 = scalar_lea.vmem [#allocation7], %s272
        // Predicated region
        $region41: #{tpu_custom_call.1} parent=31 // pred_check
          %p274 = pneg %p107
        $region42: #{tpu_custom_call.1} parent=31 // pred_check_branch
          %276 = sbr.rel (%p274) target = $region44
        $region43: #{tpu_custom_call.1} parent=31 // pred_region
          %278 = vsyncadd %s270, 0
          %s279 = smul.addr %s21, 8
          %s280 = scalar_lea.hbm %s3, %s279
          %s282 = sshll.u32 %s273, 4
          %s283 = int_to_ptr.vmem [resolvable:$true] %s282
          %s284 = sshll.u32 %s280, 4
          %s285 = int_to_ptr.hbm [resolvable:$true] %s284
          %287 = dma.vmem_to_hbm [thread:$0]  %s283, 128, %s285, %s270
        $region44: #{tpu_custom_call.1} parent=31 // pred_fallthru
          _
      $region32: #{tpu_custom_call.1} parent=5 // pred_fallthru
        _
      %p288 = scmp.le.s32.totalorder 2, %s16
      // Predicated region
      $region45: #{tpu_custom_call.1} parent=5 // pred_check
        %p289 = pneg %p288
      $region46: #{tpu_custom_call.1} parent=5 // pred_check_branch
        %291 = sbr.rel (%p289) target = $region48
      $region47: #{tpu_custom_call.1} parent=5 // pred_region
        %s292 = ssub.s32 %s16, 2
        // Predicated region
        $region49: #{tpu_custom_call.1} parent=47 // pred_check
          %p293 = pneg %p113
        $region50: #{tpu_custom_call.1} parent=47 // pred_check_branch
          %295 = sbr.rel (%p293) target = $region52
        $region51: #{tpu_custom_call.1} parent=47 // pred_region
          %s296 = sand.u32 %s98, 1
          %s297 = scalar_lea.sflag [#allocation4], %s296
          %s298 = sand.u32 %s98, 1
          %s299 = smul.addr %s298, 8
          %s300 = scalar_lea.vmem [#allocation7], %s299
          %302 = dma.done %s297, 128
        $region52: #{tpu_custom_call.1} parent=47 // pred_fallthru
          _
      $region48: #{tpu_custom_call.1} parent=5 // pred_fallthru
        _
    $region6: #{tpu_custom_call.1} parent=1 // loop_footer
      %s20 = sadd.s32 1, %s16
    $region7: #{tpu_custom_call.1} parent=1 // loop_footer_branch
      %15 = sbr.rel target = $region3
    $region8: #{tpu_custom_call.1} parent=1 // loop_exit
      _
    %303 = vsyncpa [#allocation3], 1
    %s304 = scalar_lea.sflag [#allocation3], 1
    %305 = vsyncpa %s304, 1
    %306 = vsyncpa [#allocation6], 1
    %307 = vsyncpa [#allocation4], 1
    %s308 = scalar_lea.sflag [#allocation4], 1
    %309 = vsyncpa %s308, 1

</llo_original>
